<compile_context>
chip_gen: v7x
topology: tpu7x:2x2x1
jax: 0.10.0
libtpu: 0.0.40
codegen_flags: <defaults>
</compile_context>

<pallas_src>
import functools

import jax
import jax.numpy as jnp
from jax.experimental import pallas as pl
from jax.experimental.pallas import tpu as pltpu


def _layernorm_kernel(x_ref, scale_ref, bias_ref, o_ref, *, eps: float):
    # x_ref: (row_tile, H) tile; scale_ref / bias_ref: (1, H) resident f32 VMEM.
    x = x_ref[...].astype(jnp.float32)
    h = x.shape[-1]
    inv_h = jnp.float32(1.0 / h)
    inv_hm1 = jnp.float32(1.0 / max(h - 1, 1))  # unbiased (Bessel) divisor

    mean = jnp.sum(x, axis=-1, keepdims=True) * inv_h
    diff = x - mean
    # Two-pass (mean -> centered sum of squares) kept on purpose: more stable
    # than E[x^2]-E[x]^2 and compute stays hidden under DMA anyway.
    var = jnp.sum(diff * diff, axis=-1, keepdims=True) * inv_hm1
    std = jnp.sqrt(var)

    # One exact reciprocal per row + broadcast multiply, instead of dividing
    # the full (row_tile, H) tile.  eps is added to std (module semantics).
    inv = pl.reciprocal(std + eps, approx=False)

    o_ref[...] = (diff * inv * scale_ref[...] + bias_ref[...]).astype(o_ref.dtype)


# Byte targets (chip-agnostic; no VMEM-capacity query needed).
_TRAFFIC_TARGET_BYTES = 8 * 1024 * 1024     # HBM read + write per grid step
_RESIDENCY_BUDGET_BYTES = 32 * 1024 * 1024  # double buffers + f32 temporaries
_MIN_GRID_STEPS = 16                        # >= 8 steps per TC on v7x


def _sublane_multiple(itemsize: int) -> int:
    # f32 -> 8, bf16 -> 16, int8/fp8 -> 32 (sub-32-bit dtypes pack along sublanes).
    return max(8, 32 // max(int(itemsize), 1))


def _choose_row_tile(rows: int, hidden: int, itemsize: int) -> int:
    """Byte-targeted row tile (multiple of the dtype's sublane count)."""
    sub = _sublane_multiple(itemsize)
    if rows <= sub:
        return rows  # block dim equals the full (short) row axis

    # ~8 MiB of HBM traffic per step (in tile + out tile).
    rows_from_traffic = _TRAFFIC_TARGET_BYTES // (2 * hidden * itemsize)
    # Per-step VMEM residency: 2x double-buffered in + 2x out tiles plus the
    # full-tile f32 intermediates (x_f32, diff, f32 result) the kernel creates.
    bytes_per_row_resident = hidden * (4 * itemsize + 12)
    rows_from_residency = _RESIDENCY_BUDGET_BYTES // bytes_per_row_resident

    row_tile = min(rows_from_traffic, rows_from_residency)
    row_tile = max(sub, (row_tile // sub) * sub)

    # Keep >= _MIN_GRID_STEPS grid steps for large problems so ramp/drain DMA
    # stays <~10% and both v7x TensorCores get enough steps to pipeline.
    if rows >= sub * _MIN_GRID_STEPS:
        cap = max(sub, (rows // _MIN_GRID_STEPS) // sub * sub)
        row_tile = min(row_tile, cap)

    # Don't exceed the array (keep a multiple of sub <= rows).
    row_tile = min(row_tile, (rows // sub) * sub)
    return max(row_tile, sub)


def layer_norm(x, scale, bias, *, eps: float = 1e-6, row_tile: int | None = None):
    """LayerNorm over the last axis of x with the custom PyTorch module semantics
    (unbiased std over the last axis, eps added to std).

    x     : (..., hidden)
    scale : (hidden,)
    bias  : (hidden,)
    """
    orig_shape = x.shape
    hidden = orig_shape[-1]
    rows = 1
    for d in orig_shape[:-1]:
        rows *= d
    x2 = x.reshape(rows, hidden)
    itemsize = x.dtype.itemsize

    if row_tile is None:
        row_tile = _choose_row_tile(rows, hidden, itemsize)

    # Hoist the f32 casts of the parameters out of the kernel.
    scale2 = scale.reshape(1, hidden).astype(jnp.float32)
    bias2 = bias.reshape(1, hidden).astype(jnp.float32)

    # TODO(synk): for hidden < 128 (lane-masked stores, strided HBM DMA), fold
    # groups of 128//hidden rows into the lane dimension (or pad to 128) for a
    # lane-dense output slab; real transformer hidden sizes are already dense.
    kernel = functools.partial(_layernorm_kernel, eps=float(eps))

    grid = pl.cdiv(rows, row_tile)  # trailing partial block is masked; rows independent
    param_spec = pl.BlockSpec(memory_space=pltpu.MemorySpace.VMEM)

    # Right-sized scoped VMEM: estimated per-step residency + params + margin,
    # clamped to [16 MiB, 48 MiB] (never near-physical; safe on v7x's 64 MiB/TC).
    resident_est = row_tile * hidden * (4 * itemsize + 12) + 4 * hidden * 4
    vmem_limit = int(min(48 * 1024 * 1024,
                         max(16 * 1024 * 1024, resident_est + 8 * 1024 * 1024)))

    out = pl.pallas_call(
        kernel,
        out_shape=jax.ShapeDtypeStruct((rows, hidden), x.dtype),
        grid_spec=pltpu.PrefetchScalarGridSpec(
            num_scalar_prefetch=0,
            grid=(grid,),
            in_specs=[
                pl.BlockSpec((row_tile, hidden), lambda i: (i, 0)),
                param_spec,  # scale: resident, untiled VMEM
                param_spec,  # bias : resident, untiled VMEM
            ],
            out_specs=pl.BlockSpec((row_tile, hidden), lambda i: (i, 0)),
        ),
        compiler_params=pltpu.CompilerParams(
            dimension_semantics=("parallel",),
            vmem_limit_bytes=vmem_limit,
        ),
    )(x2, scale2, bias2)

    return out.reshape(orig_shape)


def _reference(x, scale, bias, eps):
    # Same semantics as the PyTorch module: unbiased std, eps added to std.
    h = x.shape[-1]
    mean = jnp.mean(x, axis=-1, keepdims=True)
    std = jnp.sqrt(jnp.sum((x - mean) ** 2, axis=-1, keepdims=True) / (h - 1))
    return scale * ((x - mean) / (std + eps)) + bias


if __name__ == "__main__":
    key = jax.random.PRNGKey(0)
    k1, k2 = jax.random.split(key)

    batch, seq, hidden = 2, 8, 32
    x = jax.random.normal(k1, (batch, seq, hidden), dtype=jnp.float32)
    scale = jnp.ones((hidden,), dtype=jnp.float32)   # torch.ones init
    bias = jnp.zeros((hidden,), dtype=jnp.float32)   # torch.zeros init

    out = jax.block_until_ready(layer_norm(x, scale, bias, eps=1e-6))
    ref = _reference(x, scale, bias, 1e-6)
    assert jnp.allclose(out, ref, atol=1e-5, rtol=1e-5), "mismatch vs reference"

    # Row count not divisible by the sublane multiple -> exercises the masked
    # trailing block path.
    x_odd = jax.random.normal(k2, (3, 5, hidden), dtype=jnp.float32)
    out_odd = jax.block_until_ready(layer_norm(x_odd, scale, bias, eps=1e-6))
    ref_odd = _reference(x_odd, scale, bias, 1e-6)
    assert jnp.allclose(out_odd, ref_odd, atol=1e-5, rtol=1e-5), "mismatch (ragged rows)"

    print("KERNEL_OK")
</pallas_src>

<mosaic_0001>
module attributes {stable_mosaic.version = 11 : i64} {
  func.func @_layernorm_kernel(%arg0: i32, %arg1: memref<16x32xf32, #tpu.memory_space<vmem>>, %arg2: memref<1x32xf32, #tpu.memory_space<vmem>>, %arg3: memref<1x32xf32, #tpu.memory_space<vmem>>, %arg4: memref<16x32xf32, #tpu.memory_space<vmem>>) attributes {dimension_semantics = [#tpu.dimension_semantics<parallel>], iteration_bounds = array<i64: 1>, scalar_prefetch = 0 : i64, scratch_operands = 0 : i64, tpu.core_type = #tpu.core_type<tc>, window_params = [{transform_indices = @transform_0, window_bounds = array<i64: 16, 32>}, {pipeline_mode = #tpu.pipeline_mode<synchronous>, transform_indices = @transform_1, window_bounds = array<i64: 1, 32>}, {pipeline_mode = #tpu.pipeline_mode<synchronous>, transform_indices = @transform_2, window_bounds = array<i64: 1, 32>}, {transform_indices = @transform_3, window_bounds = array<i64: 16, 32>}]} {
    %c0 = arith.constant 0 : index
    %c0_0 = arith.constant 0 : index
    %0 = vector.load %arg1[%c0, %c0_0] : memref<16x32xf32, #tpu.memory_space<vmem>>, vector<16x32xf32>
    %cst = arith.constant dense<0.000000e+00> : vector<16xf32>
    %1 = vector.multi_reduction <add>, %0, %cst [1] : vector<16x32xf32> to vector<16xf32>
    %2 = vector.shape_cast %1 : vector<16xf32> to vector<16x1xf32>
    %cst_1 = arith.constant 3.125000e-02 : f32
    %3 = vector.broadcast %cst_1 : f32 to vector<16x1xf32>
    %4 = arith.mulf %2, %3 : vector<16x1xf32>
    %5 = vector.broadcast %4 : vector<16x1xf32> to vector<16x32xf32>
    %6 = arith.subf %0, %5 : vector<16x32xf32>
    %7 = arith.mulf %6, %6 : vector<16x32xf32>
    %cst_2 = arith.constant dense<0.000000e+00> : vector<16xf32>
    %8 = vector.multi_reduction <add>, %7, %cst_2 [1] : vector<16x32xf32> to vector<16xf32>
    %9 = vector.shape_cast %8 : vector<16xf32> to vector<16x1xf32>
    %cst_3 = arith.constant 0.0322580636 : f32
    %10 = vector.broadcast %cst_3 : f32 to vector<16x1xf32>
    %11 = arith.mulf %9, %10 : vector<16x1xf32>
    %12 = math.sqrt %11 : vector<16x1xf32>
    %cst_4 = arith.constant 9.99999997E-7 : f32
    %13 = vector.broadcast %cst_4 : f32 to vector<16x1xf32>
    %14 = arith.addf %12, %13 : vector<16x1xf32>
    %15 = tpu.reciprocal %14 : vector<16x1xf32> -> vector<16x1xf32>
    %16 = vector.broadcast %15 : vector<16x1xf32> to vector<16x32xf32>
    %17 = arith.mulf %6, %16 : vector<16x32xf32>
    %c0_5 = arith.constant 0 : index
    %c0_6 = arith.constant 0 : index
    %18 = vector.load %arg2[%c0_5, %c0_6] : memref<1x32xf32, #tpu.memory_space<vmem>>, vector<1x32xf32>
    %19 = vector.broadcast %18 : vector<1x32xf32> to vector<16x32xf32>
    %20 = arith.mulf %17, %19 : vector<16x32xf32>
    %c0_7 = arith.constant 0 : index
    %c0_8 = arith.constant 0 : index
    %21 = vector.load %arg3[%c0_7, %c0_8] : memref<1x32xf32, #tpu.memory_space<vmem>>, vector<1x32xf32>
    %22 = vector.broadcast %21 : vector<1x32xf32> to vector<16x32xf32>
    %23 = arith.addf %20, %22 : vector<16x32xf32>
    %c0_9 = arith.constant 0 : index
    %c0_10 = arith.constant 0 : index
    %24 = vector.load %arg4[%c0_9, %c0_10] : memref<16x32xf32, #tpu.memory_space<vmem>>, vector<16x32xf32>
    tpu.vector_store %arg4[%c0_9, %c0_10], %23 {strides = array<i32>} : memref<16x32xf32, #tpu.memory_space<vmem>>, vector<16x32xf32>,
    return
  }
  func.func @transform_0(%arg0: i32) -> (i32, i32) {
    %c0_i32 = arith.constant 0 : i32
    %c0_i32_0 = arith.constant 0 : i32
    return %arg0, %c0_i32 : i32, i32
  }
  func.func @transform_1(%arg0: i32) -> (i32, i32) {
    %c0_i32 = arith.constant 0 : i32
    %c0_i32_0 = arith.constant 0 : i32
    %c0_i32_1 = arith.constant 0 : i32
    return %c0_i32, %c0_i32_0 : i32, i32
  }
  func.func @transform_2(%arg0: i32) -> (i32, i32) {
    %c0_i32 = arith.constant 0 : i32
    %c0_i32_0 = arith.constant 0 : i32
    %c0_i32_1 = arith.constant 0 : i32
    return %c0_i32, %c0_i32_0 : i32, i32
  }
  func.func @transform_3(%arg0: i32) -> (i32, i32) {
    %c0_i32 = arith.constant 0 : i32
    %c0_i32_0 = arith.constant 0 : i32
    return %arg0, %c0_i32 : i32, i32
  }
}

</mosaic_0001>

<llo_original>
// kernel: tpu_custom_call.1
$region0: #{tpu_custom_call.1}
  #allocation0 [shape = 'u32[]', space=smem, size = 0x4, offset = 0x4, fixed_abs, tag = 'smem constant byte address 0x4 - core index']
  #allocation1 [shape = 'u32[144,128]{1,0:T(1,128)}', space=vmem, size = 0x12000, scoped, tag = 'internal scratch']
  %s0 = inlined_call_operand.hbm [shape: f32[16,32], index: 0, kind: input, shape index: {}]
  %s1 = inlined_call_operand.vmem [shape: f32[1,32], index: 1, kind: input, shape index: {}]
  %s2 = inlined_call_operand.vmem [shape: f32[1,32], index: 2, kind: input, shape index: {}]
  %s3 = inlined_call_operand.hbm [shape: f32[16,32], index: 3, kind: output, shape index: {}]
  %s4 = sld [smem:[#allocation0]]
  $region26: #{tpu_custom_call.1} parent=0
    _
  %s6 = ssub.s32 1, %s4
  %s7 = scalar_select 0, %s6, %s4
  $region1: #{tpu_custom_call.1} parent=0
    #allocation2 [shape = 'u8[8192]{0}', space=vmem, size = 0x2000, scoped, tag = 'input window, operand 0, single buffered']
    #allocation3 [shape = 's32[1]{0}', space=sflag, size = 0x4, scoped, tag = 'scoped memory for tpu_custom_call.1']
    #allocation4 [shape = 's32[1]{0}', space=sflag, size = 0x4, scoped, tag = 'scoped memory for tpu_custom_call.1']
    #allocation5 [shape = 'u8[8192]{0}', space=vmem, size = 0x2000, scoped, tag = 'output window, operand 0, single buffered']
    %8 = vsyncpa [#allocation3], 0
    %9 = vsyncpa [#allocation4], 0
    // Predicated region
    $region2: #{tpu_custom_call.1} parent=1 // pred_check
      _
    $region3: #{tpu_custom_call.1} parent=1 // pred_check_branch
      %11 = sbr.rel (0) target = $region5
    $region4: #{tpu_custom_call.1} parent=1 // pred_region
      %s13 = ssub.s32 256, 256
      %14 = vsyncadd [#allocation3], %s13
      %s15 = sshll.u32 [#allocation2], 4
      %s16 = int_to_ptr.vmem [resolvable:$true] %s15
      %21 = dma.hbm_to_vmem [thread:$0]  %s0, 256, %s16, [#allocation3], 128, 128, 8
    $region5: #{tpu_custom_call.1} parent=1 // pred_fallthru
      _
    // Predicated region
    $region6: #{tpu_custom_call.1} parent=1 // pred_check
      _
    $region7: #{tpu_custom_call.1} parent=1 // pred_check_branch
      %23 = sbr.rel (0) target = $region9
    $region8: #{tpu_custom_call.1} parent=1 // pred_region
      _
    $region9: #{tpu_custom_call.1} parent=1 // pred_fallthru
      _
    // Predicated region
    $region10: #{tpu_custom_call.1} parent=1 // pred_check
      _
    $region11: #{tpu_custom_call.1} parent=1 // pred_check_branch
      %25 = sbr.rel (0) target = $region13
    $region12: #{tpu_custom_call.1} parent=1 // pred_region
      _
    $region13: #{tpu_custom_call.1} parent=1 // pred_fallthru
      _
    // Predicated region
    $region14: #{tpu_custom_call.1} parent=1 // pred_check
      _
    $region15: #{tpu_custom_call.1} parent=1 // pred_check_branch
      %27 = sbr.rel (0) target = $region17
    $region16: #{tpu_custom_call.1} parent=1 // pred_region
      %28 = dma.done [#allocation3], 256
    $region17: #{tpu_custom_call.1} parent=1 // pred_fallthru
      _
    %v29 = vld [vmem:[#allocation2] sm:$0xff]
    %v30 = vld [vmem:[#allocation2 + $0x8] sm:$0xff]
    %vm31 = vcmask 261120
    %v32 = vsel %vm31, %v29, 0.0
    %33 = vadd.xlane.f32.xlu0 %v32
    %v34 = vpop.xlane.xlu0 %33
    %v35 = vsel %vm31, %v30, 0.0
    %36 = vadd.xlane.f32.xlu0 %v35
    %v37 = vpop.xlane.xlu0 %36
    %v38 = vmul.f32 %v34, 0.03125
    %v39 = vmul.f32 %v37, 0.03125
    %v40 = vsub.f32 %v29, %v38
    %v41 = vsub.f32 %v30, %v39
    %v42 = vmul.f32 %v40, %v40
    %v43 = vmul.f32 %v41, %v41
    %v44 = vsel %vm31, %v42, 0.0
    %45 = vadd.xlane.f32.xlu0 %v44
    %v46 = vpop.xlane.xlu0 %45
    %v47 = vsel %vm31, %v43, 0.0
    %48 = vadd.xlane.f32.xlu0 %v47
    %v49 = vpop.xlane.xlu0 %48
    %v50 = vmul.f32 %v46, 0.032258064
    %v51 = vmul.f32 %v49, 0.032258064
    %v52 = vrsqrt.pop %v50
    %v53 = vmul.f32 %v50, %v52
    %vm54 = vcmp.eq.f32.partialorder %v50, inf
    %v55 = vsel %vm54, %v50, %v53
    %vm56 = vcmp.eq.f32.partialorder %v50, 0.0
    %v57 = vand.u32 %v50, 2147483648
    %v58 = vsel %vm56, %v57, %v55
    %v59 = vrsqrt.pop %v51
    %v60 = vmul.f32 %v51, %v59
    %vm61 = vcmp.eq.f32.partialorder %v51, inf
    %v62 = vsel %vm61, %v51, %v60
    %vm63 = vcmp.eq.f32.partialorder %v51, 0.0
    %v64 = vand.u32 %v51, 2147483648
    %v65 = vsel %vm63, %v64, %v62
    %v66 = vadd.f32 %v58, 1e-06
    %v67 = vadd.f32 %v65, 1e-06
    %v68 = vrcp.pop %v66
    %v69 = vrcp.pop %v67
    %v70 = vmul.f32 %v40, %v68
    %v71 = vmul.f32 %v41, %v69
    %v72 = vld [vmem:[%s1] sm:$0x1]
    %v74 = vlaneseq
    %v75 = vshrl.u32 %v74, 7
    %v76 = vsub.s32 0, %v75
    %v77 = vrot.slane %v72, %v76
    %v79 = vmul.f32 %v70, %v77
    %v80 = vmul.f32 %v71, %v77
    %v81 = vld [vmem:[%s2] sm:$0x1]
    %v83 = vlaneseq
    %v84 = vshrl.u32 %v83, 7
    %v85 = vsub.s32 0, %v84
    %v86 = vrot.slane %v81, %v85
    %v88 = vadd.f32 %v79, %v86
    %v89 = vadd.f32 %v80, %v86
    %90 = vst.msk [vmem:[#allocation5] sm:$0xff] %vm31, %v88
    %91 = vst.msk [vmem:[#allocation5 + $0x8] sm:$0xff] %vm31, %v89
    // Predicated region
    $region18: #{tpu_custom_call.1} parent=1 // pred_check
      _
    $region19: #{tpu_custom_call.1} parent=1 // pred_check_branch
      %93 = sbr.rel (0) target = $region21
    $region20: #{tpu_custom_call.1} parent=1 // pred_region
      %s95 = ssub.s32 256, 256
      %96 = vsyncadd [#allocation4], %s95
      %s97 = sshll.u32 [#allocation5], 4
      %s98 = int_to_ptr.vmem [resolvable:$true] %s97
      %103 = dma.vmem_to_hbm [thread:$0]  %s98, 256, %s3, [#allocation4], 128, 128, 8
    $region21: #{tpu_custom_call.1} parent=1 // pred_fallthru
      _
    // Predicated region
    $region22: #{tpu_custom_call.1} parent=1 // pred_check
      _
    $region23: #{tpu_custom_call.1} parent=1 // pred_check_branch
      %105 = sbr.rel (0) target = $region25
    $region24: #{tpu_custom_call.1} parent=1 // pred_region
      %106 = dma.done [#allocation4], 256
    $region25: #{tpu_custom_call.1} parent=1 // pred_fallthru
      _
    %107 = vsyncpa [#allocation3], 1
    %108 = vsyncpa [#allocation4], 1

</llo_original>
